<compile_context>
chip_gen: v7x
topology: tpu7x:2x2x1
jax: 0.10.0
libtpu: 0.0.40
codegen_flags: <defaults>
</compile_context>

<pallas_src>
import jax
import jax.numpy as jnp
from jax.experimental import pallas as pl
from jax.experimental.pallas import tpu as pltpu

_LANES = 128

# Y = 65.481*R + 128.553*G + 24.966*B + 16 applied to trunc(x*255)/255.
# The /255 is folded into the coefficients (identical math, fewer VALU ops).
_CR = 65.481 / 255.0
_CG = 128.553 / 255.0
_CB = 24.966 / 255.0


def _to_y(img_f32):
    """img_f32: (3, rows, 128) RGB in [0, 1] -> (rows, 128) quantized Y."""
    # ToPILImage does pic.mul(255).byte(): truncation toward zero == floor for
    # inputs in [0, 1].  Inputs are assumed in [0, 1] so the clip is dropped
    # (the original .byte() wraparound for out-of-range inputs is not modeled).
    f = jnp.floor(img_f32 * 255.0)
    return jnp.round(_CR * f[0] + _CG * f[1] + _CB * f[2] + 16.0)


def _make_kernel(tile_rows, ragged, valid_last):
    def kernel(src_ref, tgt_ref, out_ref, acc_ref):
        i = pl.program_id(1)

        @pl.when(i == 0)
        def _():
            acc_ref[...] = jnp.zeros_like(acc_ref)

        src = src_ref[...].astype(jnp.float32)      # (3, tile_rows, 128)
        tgt = tgt_ref[...].astype(jnp.float32)
        dy = _to_y(src) - _to_y(tgt)                # (tile_rows, 128)
        d2 = dy * dy

        if ragged:
            # Mask only where it can matter: the single global last tile whose
            # block extends past the (padded) row count.
            is_last = jnp.logical_and(
                pl.program_id(0) == pl.num_programs(0) - 1,
                pl.program_id(1) == pl.num_programs(1) - 1,
            )

            @pl.when(is_last)
            def _():
                rows = jax.lax.broadcasted_iota(jnp.int32, (tile_rows, _LANES), 0)
                acc_ref[...] += jnp.where(rows < valid_last, d2, 0.0)

            @pl.when(jnp.logical_not(is_last))
            def _():
                acc_ref[...] += d2
        else:
            # Exact tiling: no mask code emitted at all (pure VPU accumulate).
            acc_ref[...] += d2

        @pl.when(i == pl.num_programs(1) - 1)
        def _():
            # One cross-lane (XLU) reduction per split; lane-dense (8,128) block.
            out_ref[...] = jnp.full((8, _LANES), jnp.sum(acc_ref[...]), jnp.float32)

    return kernel


def psnr(source: jnp.ndarray, target: jnp.ndarray, tile_rows: int | None = None) -> jnp.ndarray:
    assert source.shape == target.shape
    C, H, W = source.shape
    assert C == 3, "tensor_to_y expects an RGB image (C=3)"

    N = H * W
    cdiv = lambda a, b: -(-a // b)
    P = cdiv(N, _LANES)                 # number of 128-lane rows per channel
    pad = P * _LANES - N

    # Lane-dense view: flatten each channel's pixels and tile as (3, P, 128).
    src = source.reshape(C, N)
    tgt = target.reshape(C, N)
    if pad:
        # Pad BOTH inputs with the same constant -> padded lanes give dy == 0
        # exactly, so no in-kernel masking of the flat tail is needed.
        src = jnp.pad(src, ((0, 0), (0, pad)))
        tgt = jnp.pad(tgt, ((0, 0), (0, pad)))
    src = src.reshape(C, P, _LANES)
    tgt = tgt.reshape(C, P, _LANES)

    itemsize = jnp.dtype(source.dtype).itemsize

    # Generation-gated VMEM budget (v7x: 64 MiB per TC; v5e/v6e: 128 MiB).
    vmem_cap = 64 << 20
    try:
        vmem_cap = getattr(pltpu.get_tpu_info(), "vmem_capacity_bytes", vmem_cap)
    except Exception:
        pass
    if vmem_cap <= (64 << 20):
        data_budget, vmem_limit, row_cap = 20 << 20, 48 << 20, 512
    else:
        data_budget, vmem_limit, row_cap = 40 << 20, 96 << 20, 1024

    if tile_rows is None:
        # 2 inputs x 2 pipeline buffers x (3, 1, 128) + one f32 accumulator row.
        per_row = 2 * 2 * C * _LANES * itemsize + 4 * _LANES
        tile_rows = max(8, min(row_cap, (data_budget // per_row) // 8 * 8))
    else:
        tile_rows = max(8, (tile_rows // 8) * 8)
    if tile_rows >= P:
        tile_rows = P                   # full-extent block is always legal

    total_tiles = cdiv(P, tile_rows)
    if total_tiles > 1 and total_tiles % 2 == 1:
        # Try a slightly smaller tile so the tile count becomes even: keeps the
        # 2-way split without a fully dead (clamped) tile.
        r = max(8, cdiv(cdiv(P, total_tiles + 1), 8) * 8)
        if r <= tile_rows and cdiv(P, r) % 2 == 0:
            tile_rows = r
            total_tiles = cdiv(P, r)
    num_splits = 2 if (total_tiles >= 2 and total_tiles % 2 == 0) else 1
    tiles_per_split = total_tiles // num_splits
    ragged = (P % tile_rows) != 0
    valid_last = P - (total_tiles - 1) * tile_rows   # rows valid in last tile

    def in_map(s, i):
        return (0, s * tiles_per_split + i, 0)

    out = pl.pallas_call(
        _make_kernel(tile_rows, ragged, valid_last),
        out_shape=jax.ShapeDtypeStruct((num_splits * 8, _LANES), jnp.float32),
        grid_spec=pltpu.PrefetchScalarGridSpec(
            num_scalar_prefetch=0,
            grid=(num_splits, tiles_per_split),
            in_specs=[
                pl.BlockSpec((C, tile_rows, _LANES), in_map),
                pl.BlockSpec((C, tile_rows, _LANES), in_map),
            ],
            out_specs=pl.BlockSpec((8, _LANES), lambda s, i: (s, 0)),
            scratch_shapes=[pltpu.VMEM((tile_rows, _LANES), jnp.float32)],
        ),
        # On v7x the leading size-2 axis should shard across the 2 TensorCores;
        # if a profile shows one idle TC, switch axis 0 to pltpu.CORE_PARALLEL.
        compiler_params=pltpu.CompilerParams(
            dimension_semantics=("parallel", "arbitrary"),
            vmem_limit_bytes=vmem_limit,
        ),
    )(src, tgt)

    sq_sum = jnp.sum(out[0::8, 0])      # one partial sum per split
    mse = sq_sum / jnp.float32(N)
    # NOTE: the reference uses 1.0 / MSE (not 255^2 / MSE); reproduced exactly.
    return 10.0 * jnp.log10(1.0 / mse)


def _psnr_ref(source, target):
    # Pure-JAX reference (same folded-constant f32 formula as the kernel).
    def to_y(img):
        f = jnp.floor(img * 255.0)
        return jnp.round(_CR * f[0] + _CG * f[1] + _CB * f[2] + 16.0)

    d = to_y(source) - to_y(target)
    return 10.0 * jnp.log10(1.0 / jnp.mean(d * d))


def _run_case(key, H, W, tile_rows=None):
    k1, k2 = jax.random.split(key)
    src = jax.random.uniform(k1, (3, H, W), dtype=jnp.float32)
    tgt = jnp.clip(src + 0.05 * jax.random.normal(k2, (3, H, W), dtype=jnp.float32), 0.0, 1.0)
    out = jax.block_until_ready(psnr(src, tgt, tile_rows=tile_rows))
    ref = jax.block_until_ready(_psnr_ref(src, tgt))
    assert jnp.isfinite(out), f"PSNR not finite for {(H, W)}"
    assert jnp.allclose(out, ref, rtol=1e-5, atol=1e-5), (H, W, out, ref)


if __name__ == "__main__":
    key = jax.random.PRNGKey(0)
    keys = jax.random.split(key, 4)

    # Case 1: H*W multiple of 128, single full-extent tile (no pad, no mask).
    _run_case(keys[0], 16, 16)
    # Case 2: H*W NOT a multiple of 128 -> flat-tail padding path, single tile.
    _run_case(keys[1], 20, 16)
    # Case 3: multi-tile, exact division -> 2-way split, no mask code emitted.
    _run_case(keys[2], 32, 64, tile_rows=8)
    # Case 4: padding + ragged last tile + multi-tile reduction (1 split).
    _run_case(keys[3], 40, 52, tile_rows=8)

    print("KERNEL_OK")
</pallas_src>

<mosaic_0001>
module attributes {stable_mosaic.version = 11 : i64} {
  func.func @kernel(%arg0: i32, %arg1: i32, %arg2: memref<3x2x128xf32, #tpu.memory_space<vmem>>, %arg3: memref<3x2x128xf32, #tpu.memory_space<vmem>>, %arg4: memref<8x128xf32, #tpu.memory_space<vmem>>, %arg5: memref<2x128xf32, #tpu.memory_space<vmem>>) attributes {dimension_semantics = [#tpu.dimension_semantics<parallel>, #tpu.dimension_semantics<arbitrary>], iteration_bounds = array<i64: 1, 1>, scalar_prefetch = 0 : i64, scratch_operands = 1 : i64, tpu.core_type = #tpu.core_type<tc>, window_params = [{transform_indices = @transform_0, window_bounds = array<i64: 3, 2, 128>}, {transform_indices = @transform_1, window_bounds = array<i64: 3, 2, 128>}, {transform_indices = @transform_2, window_bounds = array<i64: 8, 128>}]} {
    %c0_i32 = arith.constant 0 : i32
    %0 = arith.cmpi eq, %arg1, %c0_i32 : i32
    %1 = arith.extui %0 : i1 to i32
    %c0_i32_0 = arith.constant 0 : i32
    %2 = arith.cmpi ne, %1, %c0_i32_0 : i32
    scf.if %2 {
      %cst_21 = arith.constant 0.000000e+00 : f32
      %53 = vector.broadcast %cst_21 : f32 to vector<2x128xf32>
      %c0_22 = arith.constant 0 : index
      %c0_23 = arith.constant 0 : index
      %54 = vector.load %arg5[%c0_22, %c0_23] : memref<2x128xf32, #tpu.memory_space<vmem>>, vector<2x128xf32>
      tpu.vector_store %arg5[%c0_22, %c0_23], %53 {strides = array<i32>} : memref<2x128xf32, #tpu.memory_space<vmem>>, vector<2x128xf32>,
    } else {
    }
    %c0 = arith.constant 0 : index
    %c0_1 = arith.constant 0 : index
    %c0_2 = arith.constant 0 : index
    %3 = vector.load %arg2[%c0, %c0_1, %c0_2] : memref<3x2x128xf32, #tpu.memory_space<vmem>>, vector<3x2x128xf32>
    %c0_3 = arith.constant 0 : index
    %c0_4 = arith.constant 0 : index
    %c0_5 = arith.constant 0 : index
    %4 = vector.load %arg3[%c0_3, %c0_4, %c0_5] : memref<3x2x128xf32, #tpu.memory_space<vmem>>, vector<3x2x128xf32>
    %cst = arith.constant 2.550000e+02 : f32
    %5 = vector.broadcast %cst : f32 to vector<3x2x128xf32>
    %6 = arith.mulf %3, %5 : vector<3x2x128xf32>
    %7 = math.floor %6 : vector<3x2x128xf32>
    %8 = vector.extract_strided_slice %7 {offsets = [0, 0, 0], sizes = [1, 2, 128], strides = [1, 1, 1]} : vector<3x2x128xf32> to vector<1x2x128xf32>
    %9 = vector.shape_cast %8 : vector<1x2x128xf32> to vector<2x128xf32>
    %cst_6 = arith.constant 0.256788224 : f32
    %10 = vector.broadcast %cst_6 : f32 to vector<2x128xf32>
    %11 = arith.mulf %10, %9 : vector<2x128xf32>
    %12 = vector.extract_strided_slice %7 {offsets = [1, 0, 0], sizes = [1, 2, 128], strides = [1, 1, 1]} : vector<3x2x128xf32> to vector<1x2x128xf32>
    %13 = vector.shape_cast %12 : vector<1x2x128xf32> to vector<2x128xf32>
    %cst_7 = arith.constant 0.50412941 : f32
    %14 = vector.broadcast %cst_7 : f32 to vector<2x128xf32>
    %15 = arith.mulf %14, %13 : vector<2x128xf32>
    %16 = arith.addf %11, %15 : vector<2x128xf32>
    %17 = vector.extract_strided_slice %7 {offsets = [2, 0, 0], sizes = [1, 2, 128], strides = [1, 1, 1]} : vector<3x2x128xf32> to vector<1x2x128xf32>
    %18 = vector.shape_cast %17 : vector<1x2x128xf32> to vector<2x128xf32>
    %cst_8 = arith.constant 0.0979058817 : f32
    %19 = vector.broadcast %cst_8 : f32 to vector<2x128xf32>
    %20 = arith.mulf %19, %18 : vector<2x128xf32>
    %21 = arith.addf %16, %20 : vector<2x128xf32>
    %cst_9 = arith.constant 1.600000e+01 : f32
    %22 = vector.broadcast %cst_9 : f32 to vector<2x128xf32>
    %23 = arith.addf %21, %22 : vector<2x128xf32>
    %24 = math.roundeven %23 : vector<2x128xf32>
    %cst_10 = arith.constant 2.550000e+02 : f32
    %25 = vector.broadcast %cst_10 : f32 to vector<3x2x128xf32>
    %26 = arith.mulf %4, %25 : vector<3x2x128xf32>
    %27 = math.floor %26 : vector<3x2x128xf32>
    %28 = vector.extract_strided_slice %27 {offsets = [0, 0, 0], sizes = [1, 2, 128], strides = [1, 1, 1]} : vector<3x2x128xf32> to vector<1x2x128xf32>
    %29 = vector.shape_cast %28 : vector<1x2x128xf32> to vector<2x128xf32>
    %cst_11 = arith.constant 0.256788224 : f32
    %30 = vector.broadcast %cst_11 : f32 to vector<2x128xf32>
    %31 = arith.mulf %30, %29 : vector<2x128xf32>
    %32 = vector.extract_strided_slice %27 {offsets = [1, 0, 0], sizes = [1, 2, 128], strides = [1, 1, 1]} : vector<3x2x128xf32> to vector<1x2x128xf32>
    %33 = vector.shape_cast %32 : vector<1x2x128xf32> to vector<2x128xf32>
    %cst_12 = arith.constant 0.50412941 : f32
    %34 = vector.broadcast %cst_12 : f32 to vector<2x128xf32>
    %35 = arith.mulf %34, %33 : vector<2x128xf32>
    %36 = arith.addf %31, %35 : vector<2x128xf32>
    %37 = vector.extract_strided_slice %27 {offsets = [2, 0, 0], sizes = [1, 2, 128], strides = [1, 1, 1]} : vector<3x2x128xf32> to vector<1x2x128xf32>
    %38 = vector.shape_cast %37 : vector<1x2x128xf32> to vector<2x128xf32>
    %cst_13 = arith.constant 0.0979058817 : f32
    %39 = vector.broadcast %cst_13 : f32 to vector<2x128xf32>
    %40 = arith.mulf %39, %38 : vector<2x128xf32>
    %41 = arith.addf %36, %40 : vector<2x128xf32>
    %cst_14 = arith.constant 1.600000e+01 : f32
    %42 = vector.broadcast %cst_14 : f32 to vector<2x128xf32>
    %43 = arith.addf %41, %42 : vector<2x128xf32>
    %44 = math.roundeven %43 : vector<2x128xf32>
    %45 = arith.subf %24, %44 : vector<2x128xf32>
    %46 = arith.mulf %45, %45 : vector<2x128xf32>
    %c0_15 = arith.constant 0 : index
    %c0_16 = arith.constant 0 : index
    %47 = vector.load %arg5[%c0_15, %c0_16] : memref<2x128xf32, #tpu.memory_space<vmem>>, vector<2x128xf32>
    %48 = arith.addf %47, %46 : vector<2x128xf32>
    %c0_17 = arith.constant 0 : index
    %c0_18 = arith.constant 0 : index
    %49 = vector.load %arg5[%c0_17, %c0_18] : memref<2x128xf32, #tpu.memory_space<vmem>>, vector<2x128xf32>
    tpu.vector_store %arg5[%c0_17, %c0_18], %48 {strides = array<i32>} : memref<2x128xf32, #tpu.memory_space<vmem>>, vector<2x128xf32>,
    %c0_i32_19 = arith.constant 0 : i32
    %50 = arith.cmpi eq, %arg1, %c0_i32_19 : i32
    %51 = arith.extui %50 : i1 to i32
    %c0_i32_20 = arith.constant 0 : i32
    %52 = arith.cmpi ne, %51, %c0_i32_20 : i32
    scf.if %52 {
      %c0_21 = arith.constant 0 : index
      %c0_22 = arith.constant 0 : index
      %53 = vector.load %arg5[%c0_21, %c0_22] : memref<2x128xf32, #tpu.memory_space<vmem>>, vector<2x128xf32>
      %54 = vector.shape_cast %53 : vector<2x128xf32> to vector<1x2x128xf32>
      %cst_23 = arith.constant dense<0.000000e+00> : vector<1xf32>
      %55 = vector.multi_reduction <add>, %54, %cst_23 [1, 2] : vector<1x2x128xf32> to vector<1xf32>
      %56 = vector.shape_cast %55 : vector<1xf32> to vector<1x1x1xf32>
      %57 = vector.extract %56[0, 0, 0] : f32 from vector<1x1x1xf32>
      %58 = vector.broadcast %57 : f32 to vector<8x128xf32>
      %c0_24 = arith.constant 0 : index
      %c0_25 = arith.constant 0 : index
      %59 = vector.load %arg4[%c0_24, %c0_25] : memref<8x128xf32, #tpu.memory_space<vmem>>, vector<8x128xf32>
      tpu.vector_store %arg4[%c0_24, %c0_25], %58 {strides = array<i32>} : memref<8x128xf32, #tpu.memory_space<vmem>>, vector<8x128xf32>,
    } else {
    }
    return
  }
  func.func @transform_0(%arg0: i32, %arg1: i32) -> (i32, i32, i32) {
    %c1_i32 = arith.constant 1 : i32
    %0 = arith.muli %arg0, %c1_i32 : i32
    %1 = arith.addi %0, %arg1 : i32
    %c0_i32 = arith.constant 0 : i32
    %c0_i32_0 = arith.constant 0 : i32
    %c0_i32_1 = arith.constant 0 : i32
    return %c0_i32, %1, %c0_i32_0 : i32, i32, i32
  }
  func.func @transform_1(%arg0: i32, %arg1: i32) -> (i32, i32, i32) {
    %c1_i32 = arith.constant 1 : i32
    %0 = arith.muli %arg0, %c1_i32 : i32
    %1 = arith.addi %0, %arg1 : i32
    %c0_i32 = arith.constant 0 : i32
    %c0_i32_0 = arith.constant 0 : i32
    %c0_i32_1 = arith.constant 0 : i32
    return %c0_i32, %1, %c0_i32_0 : i32, i32, i32
  }
  func.func @transform_2(%arg0: i32, %arg1: i32) -> (i32, i32) {
    %c0_i32 = arith.constant 0 : i32
    %c0_i32_0 = arith.constant 0 : i32
    return %arg0, %c0_i32 : i32, i32
  }
}

</mosaic_0001>

<llo_original>
// kernel: tpu_custom_call.1
$region0: #{tpu_custom_call.1}
  #allocation0 [shape = 'u32[]', space=smem, size = 0x4, offset = 0x4, fixed_abs, tag = 'smem constant byte address 0x4 - core index']
  #allocation1 [shape = 'u32[144,128]{1,0:T(1,128)}', space=vmem, size = 0x12000, scoped, tag = 'internal scratch']
  #allocation2 [shape = 'f32[2,128]{1,0:T(2,128)}', space=vmem, size = 0x400, scoped, tag = 'scratch operand']
  %s0 = inlined_call_operand.hbm [shape: f32[3,2,128], index: 0, kind: input, shape index: {}]
  %s1 = inlined_call_operand.hbm [shape: f32[3,2,128], index: 1, kind: input, shape index: {}]
  %s2 = inlined_call_operand.hbm [shape: f32[8,128], index: 2, kind: output, shape index: {}]
  %s3 = sld [smem:[#allocation0]]
  $region34: #{tpu_custom_call.1} parent=0
    _
  %s5 = ssub.s32 1, %s3
  %s6 = scalar_select 0, %s5, %s3
  $region1: #{tpu_custom_call.1} parent=0
    #allocation3 [shape = 'u8[3072]{0}', space=vmem, size = 0xc00, scoped, tag = 'input window, operand 0, single buffered']
    #allocation4 [shape = 's32[1]{0}', space=sflag, size = 0x4, scoped, tag = 'scoped memory for tpu_custom_call.1']
    #allocation5 [shape = 's32[1]{0}', space=sflag, size = 0x4, scoped, tag = 'scoped memory for tpu_custom_call.1']
    #allocation6 [shape = 'u8[3072]{0}', space=vmem, size = 0xc00, scoped, tag = 'input window, operand 1, single buffered']
    #allocation7 [shape = 's32[1]{0}', space=sflag, size = 0x4, scoped, tag = 'scoped memory for tpu_custom_call.1']
    #allocation8 [shape = 'u8[4096]{0}', space=vmem, size = 0x1000, scoped, tag = 'output window, operand 0, single buffered']
    %7 = vsyncpa [#allocation4], 0
    %8 = vsyncpa [#allocation7], 0
    %9 = vsyncpa [#allocation5], 0
    // Predicated region
    $region2: #{tpu_custom_call.1} parent=1 // pred_check
      _
    $region3: #{tpu_custom_call.1} parent=1 // pred_check_branch
      %11 = sbr.rel (0) target = $region5
    $region4: #{tpu_custom_call.1} parent=1 // pred_region
      %s12 = sadd.s32 0, 0
      %s14 = ssub.s32 96, 96
      %15 = vsyncadd [#allocation4], %s14
      %s16 = smul.addr %s12, 32
      %s17 = scalar_lea.hbm %s0, %s16
      %s18 = sshll.u32 [#allocation3], 4
      %s19 = int_to_ptr.vmem [resolvable:$true] %s18
      %24 = dma.hbm_to_vmem [thread:$0]  %s17, 96, %s19, [#allocation4], 32, 32, 2
    $region5: #{tpu_custom_call.1} parent=1 // pred_fallthru
      _
    // Predicated region
    $region6: #{tpu_custom_call.1} parent=1 // pred_check
      _
    $region7: #{tpu_custom_call.1} parent=1 // pred_check_branch
      %26 = sbr.rel (0) target = $region9
    $region8: #{tpu_custom_call.1} parent=1 // pred_region
      %s27 = sadd.s32 0, 0
      %s29 = ssub.s32 96, 96
      %30 = vsyncadd [#allocation7], %s29
      %s31 = smul.addr %s27, 32
      %s32 = scalar_lea.hbm %s1, %s31
      %s33 = sshll.u32 [#allocation6], 4
      %s34 = int_to_ptr.vmem [resolvable:$true] %s33
      %39 = dma.hbm_to_vmem [thread:$0]  %s32, 96, %s34, [#allocation7], 32, 32, 2
    $region9: #{tpu_custom_call.1} parent=1 // pred_fallthru
      _
    // Predicated region
    $region10: #{tpu_custom_call.1} parent=1 // pred_check
      _
    $region11: #{tpu_custom_call.1} parent=1 // pred_check_branch
      %41 = sbr.rel (0) target = $region13
    $region12: #{tpu_custom_call.1} parent=1 // pred_region
      %42 = dma.done [#allocation4], 96
    $region13: #{tpu_custom_call.1} parent=1 // pred_fallthru
      _
    // Predicated region
    $region14: #{tpu_custom_call.1} parent=1 // pred_check
      _
    $region15: #{tpu_custom_call.1} parent=1 // pred_check_branch
      %44 = sbr.rel (0) target = $region17
    $region16: #{tpu_custom_call.1} parent=1 // pred_region
      %45 = dma.done [#allocation7], 96
    $region17: #{tpu_custom_call.1} parent=1 // pred_fallthru
      _
    %s46 = sadd.s32 0, 0
    %s47 = sadd.s32 0, 0
    %p48 = scmp.eq.s32.totalorder 0, 0
    // Predicated region
    $region18: #{tpu_custom_call.1} parent=1 // pred_check
      %p49 = pneg %p48
    $region19: #{tpu_custom_call.1} parent=1 // pred_check_branch
      %51 = sbr.rel (%p49) target = $region21
    $region20: #{tpu_custom_call.1} parent=1 // pred_region
      %52 = vst [vmem:[#allocation2] sm:$0x3] 0.0
    $region21: #{tpu_custom_call.1} parent=1 // pred_fallthru
      _
    %v53 = vld [vmem:[#allocation3] sm:$0x3]
    %v54 = vld [vmem:[#allocation3 + $0x2] sm:$0x3]
    %v55 = vld [vmem:[#allocation3 + $0x4] sm:$0x3]
    %v56 = vld [vmem:[#allocation6] sm:$0x3]
    %v57 = vld [vmem:[#allocation6 + $0x2] sm:$0x3]
    %v58 = vld [vmem:[#allocation6 + $0x4] sm:$0x3]
    %v59 = vmul.f32 %v53, 255.0
    %v60 = vmul.f32 %v54, 255.0
    %v61 = vmul.f32 %v55, 255.0
    %v62 = vfloor.f32 %v59
    %v63 = vfloor.f32 %v60
    %v64 = vfloor.f32 %v61
    %v65 = vmul.f32 %v62, 0.25678822
    %v66 = vmul.f32 %v63, 0.5041294
    %v67 = vadd.f32 %v65, %v66
    %v68 = vmul.f32 %v64, 0.09790588
    %v69 = vadd.f32 %v67, %v68
    %v70 = vadd.f32 %v69, 16.0
    %v71 = vround.ne.pseudo %v70
    %v72 = vmul.f32 %v56, 255.0
    %v73 = vmul.f32 %v57, 255.0
    %v74 = vmul.f32 %v58, 255.0
    %v75 = vfloor.f32 %v72
    %v76 = vfloor.f32 %v73
    %v77 = vfloor.f32 %v74
    %v78 = vmul.f32 %v75, 0.25678822
    %v79 = vmul.f32 %v76, 0.5041294
    %v80 = vadd.f32 %v78, %v79
    %v81 = vmul.f32 %v77, 0.09790588
    %v82 = vadd.f32 %v80, %v81
    %v83 = vadd.f32 %v82, 16.0
    %v84 = vround.ne.pseudo %v83
    %v85 = vsub.f32 %v71, %v84
    %v86 = vmul.f32 %v85, %v85
    %v87 = vld [vmem:[#allocation2] sm:$0x3]
    %v88 = vadd.f32 %v87, %v86
    %89 = vst [vmem:[#allocation2] sm:$0x3] %v88
    // Predicated region
    $region22: #{tpu_custom_call.1} parent=1 // pred_check
      %p90 = pneg %p48
    $region23: #{tpu_custom_call.1} parent=1 // pred_check_branch
      %92 = sbr.rel (%p90) target = $region25
    $region24: #{tpu_custom_call.1} parent=1 // pred_region
      %v93 = vld [vmem:[#allocation2] sm:$0x3]
      %vm94 = vcmask 1041408
      %v95 = vsel %vm94, %v93, 0.0
      %96 = vadd.xlane.f32.xlu0 %v95
      %v97 = vpop.xlane.xlu0 %96
      %v98 = vrot.slane %v97, 4
      %v99 = vadd.f32 %v97, %v98
      %v100 = vrot.slane %v99, 2
      %v101 = vadd.f32 %v99, %v100
      %v102 = vrot.slane %v101, 1
      %v103 = vadd.f32 %v101, %v102
      %s104 = vtos %v103
      %v105 = vstv %s104
      %106 = vst [vmem:[#allocation8] sm:$0xff] %v105
    $region25: #{tpu_custom_call.1} parent=1 // pred_fallthru
      _
    // Predicated region
    $region26: #{tpu_custom_call.1} parent=1 // pred_check
      _
    $region27: #{tpu_custom_call.1} parent=1 // pred_check_branch
      %108 = sbr.rel (0) target = $region29
    $region28: #{tpu_custom_call.1} parent=1 // pred_region
      %s110 = ssub.s32 128, 128
      %111 = vsyncadd [#allocation5], %s110
      %s113 = sshll.u32 [#allocation8], 4
      %s114 = int_to_ptr.vmem [resolvable:$true] %s113
      %116 = dma.vmem_to_hbm [thread:$0]  %s114, 128, %s2, [#allocation5]
    $region29: #{tpu_custom_call.1} parent=1 // pred_fallthru
      _
    // Predicated region
    $region30: #{tpu_custom_call.1} parent=1 // pred_check
      _
    $region31: #{tpu_custom_call.1} parent=1 // pred_check_branch
      %118 = sbr.rel (0) target = $region33
    $region32: #{tpu_custom_call.1} parent=1 // pred_region
      %119 = dma.done [#allocation5], 128
    $region33: #{tpu_custom_call.1} parent=1 // pred_fallthru
      _
    %120 = vsyncpa [#allocation4], 1
    %121 = vsyncpa [#allocation7], 1
    %122 = vsyncpa [#allocation5], 1

</llo_original>
